<compile_context>
chip_gen: v7x
topology: tpu7x:2x2x1
jax: 0.10.0
libtpu: 0.0.40
codegen_flags: <defaults>
</compile_context>

<pallas_src>
import functools

import jax
import jax.numpy as jnp
from jax.experimental import pallas as pl
from jax.experimental.pallas import tpu as pltpu

EPS = 1e-5  # eps of BatchNorm2d, the custom LN branch, and GroupNorm (all 1e-5)

_VMEM_LIMIT = 48 * 1024 * 1024          # safe on v7x (64 MiB physical) and v5e/v6e (128 MiB)
_FUSED_MAX_F32_BYTES = 6 * 1024 * 1024  # padded f32 slab gate for the resident-x fused path


def _round_up(v, m):
    return -(-v // m) * m


def _col_tile(dim, cap):
    """cap must be a multiple of 128; full extent is always legal."""
    return dim if dim <= cap else cap


def _row_tile(dim, cap, align):
    cap = max(align, (cap // align) * align)
    return dim if dim <= cap else cap


# ---------------------------------------------------------------------------
# Fused path: x resident in VMEM, moments + affine fold + apply in one kernel.
# x is viewed as (N, G, cg, HW) so that BatchNorm / LN' / GroupNorm statistics
# are all plain axis reductions (leading / sublane / lane) — no in-kernel
# reshape, transpose, or gather.  Affine params arrive pre-scaled by
# softmax(arch_weights) as (1, G, cg, 1) blocks.
# ---------------------------------------------------------------------------
def _fused_kernel(x_ref, bnw_ref, bnb_ref, lnw_ref, lnb_ref, gnw_ref, gnb_ref,
                  o_ref, *, n, c, cg, hw):
    xf = x_ref[...].astype(jnp.float32)                        # (N, G, cg, HW)
    rs = jnp.sum(xf, axis=3, keepdims=True)                    # (N, G, cg, 1)
    rq = jnp.sum(xf * xf, axis=3, keepdims=True)

    # GroupNorm: per-(sample, group) stats over (cg, H, W).
    gn_sum = jnp.sum(rs, axis=2, keepdims=True)                # (N, G, 1, 1)
    gn_sq = jnp.sum(rq, axis=2, keepdims=True)
    gn_cnt = float(cg * hw)
    gn_mean = gn_sum / gn_cnt
    gn_var = jnp.maximum(gn_sq / gn_cnt - gn_mean * gn_mean, 0.0)
    gn_inv = jax.lax.rsqrt(gn_var + EPS)

    # Custom "LayerNorm" branch: per-sample stats over (C, H, W).
    ln_sum = jnp.sum(gn_sum, axis=1, keepdims=True)            # (N, 1, 1, 1)
    ln_sq = jnp.sum(gn_sq, axis=1, keepdims=True)
    ln_cnt = float(c * hw)
    ln_mean = ln_sum / ln_cnt
    ln_var = jnp.maximum(ln_sq / ln_cnt - ln_mean * ln_mean, 0.0)
    ln_inv = jax.lax.rsqrt(ln_var + EPS)

    # BatchNorm2d (training mode): per-channel stats over (N, H, W).
    bn_sum = jnp.sum(rs, axis=0, keepdims=True)                # (1, G, cg, 1)
    bn_sq = jnp.sum(rq, axis=0, keepdims=True)
    bn_cnt = float(n * hw)
    bn_mean = bn_sum / bn_cnt
    bn_var = jnp.maximum(bn_sq / bn_cnt - bn_mean * bn_mean, 0.0)
    bn_inv = jax.lax.rsqrt(bn_var + EPS)

    bnw = bnw_ref[...]; bnb = bnb_ref[...]                     # (1, G, cg, 1), pre-scaled by w
    lnw = lnw_ref[...]; lnb = lnb_ref[...]
    gnw = gnw_ref[...]; gnb = gnb_ref[...]

    a = bnw * bn_inv + lnw * ln_inv + gnw * gn_inv             # (N, G, cg, 1)
    b = ((bnb - bnw * bn_mean * bn_inv)
         + (lnb - lnw * ln_mean * ln_inv)
         + (gnb - gnw * gn_mean * gn_inv))
    o_ref[...] = (xf * a + b).astype(o_ref.dtype)


# ---------------------------------------------------------------------------
# Two-pass path kernels.
# ---------------------------------------------------------------------------
def _row_moments_kernel(x_ref, sum_ref, sq_ref, *, hw, tc, mask_cols):
    """Accumulate per-row sum / sum-of-squares across the column (reduction) axis."""
    j = pl.program_id(1)
    x = x_ref[...].astype(jnp.float32)
    if mask_cols:  # padded edge column-blocks: zero out-of-range columns
        col = jax.lax.broadcasted_iota(jnp.int32, x.shape, 1)
        x = jnp.where(j * tc + col < hw, x, 0.0)
    ps = jnp.sum(x, axis=1, keepdims=True)
    pq = jnp.sum(x * x, axis=1, keepdims=True)

    @pl.when(j == 0)
    def _():
        sum_ref[...] = ps
        sq_ref[...] = pq

    @pl.when(j > 0)
    def _():
        sum_ref[...] += ps
        sq_ref[...] += pq


def _apply_affine_kernel(x_ref, a_ref, b_ref, o_ref):
    """out = x * A[row] + B[row]; A/B are (TR, 1) and broadcast across lanes."""
    o_ref[...] = (x_ref[...].astype(jnp.float32) * a_ref[...] + b_ref[...]).astype(o_ref.dtype)


# ---------------------------------------------------------------------------
# Wrapper.
# ---------------------------------------------------------------------------
def mixed_normalization_2d(x, arch_weights, bn_weight, bn_bias,
                           ln_weight, ln_bias, gn_weight, gn_bias, *,
                           fused_max_f32_bytes=_FUSED_MAX_F32_BYTES,
                           p1_col_cap=8192, p2_col_cap=4096,
                           p1_max_elems=2 * 1024 * 1024,
                           p2_max_elems=(3 * 1024 * 1024) // 2):
    """x: (N, C, H, W). arch_weights: (3,) raw (pre-softmax) DARTS params.
    bn_/ln_/gn_ weight & bias: per-channel (C,) affine params."""
    N, C, H, W = x.shape
    HW = H * W
    NR = N * C
    G = min(32, C)
    assert C % G == 0, "GroupNorm requires num_channels % num_groups == 0"
    cg = C // G

    f32 = jnp.float32
    itemsize = jnp.dtype(x.dtype).itemsize
    row_align = max(8, 32 // itemsize)     # 8 for f32, 16 for bf16, 32 for 8-bit

    # Fold softmax(arch_weights) into the per-channel affines (O(C) glue).
    w = jax.nn.softmax(arch_weights.astype(f32), axis=0)
    bnw = w[0] * bn_weight.astype(f32); bnb = w[0] * bn_bias.astype(f32)
    lnw = w[1] * ln_weight.astype(f32); lnb = w[1] * ln_bias.astype(f32)
    gnw = w[2] * gn_weight.astype(f32); gnb = w[2] * gn_bias.astype(f32)

    # ---------------- Fused single-kernel path (2x HBM traffic) ----------------
    padded_f32 = N * G * _round_up(cg, row_align) * _round_up(HW, 128) * 4
    if padded_f32 <= fused_max_f32_bytes:
        x4 = x.reshape(N, G, cg, HW)

        def p4(v):
            return v.reshape(1, G, cg, 1)

        kernel = functools.partial(_fused_kernel, n=N, c=C, cg=cg, hw=HW)
        full = pl.BlockSpec((N, G, cg, HW), lambda i: (0, 0, 0, 0))
        par = pl.BlockSpec((1, G, cg, 1), lambda i: (0, 0, 0, 0))
        cost = pl.CostEstimate(flops=10 * NR * HW,
                               transcendentals=C + N + N * G,
                               bytes_accessed=2 * x.size * itemsize)
        out4 = pl.pallas_call(
            kernel,
            out_shape=jax.ShapeDtypeStruct((N, G, cg, HW), x.dtype),
            grid=(1,),
            in_specs=[full, par, par, par, par, par, par],
            out_specs=full,
            compiler_params=pltpu.CompilerParams(
                dimension_semantics=("arbitrary",),
                vmem_limit_bytes=_VMEM_LIMIT),
            cost_estimate=cost,
        )(x4, p4(bnw), p4(bnb), p4(lnw), p4(lnb), p4(gnw), p4(gnb))
        return out4.reshape(N, C, H, W)

    # ---------------- Two-pass tiled path (large x) ----------------
    x2 = x.reshape(NR, HW)

    # Pass 1: per-(n,c) moments. Only x is double-buffered -> larger column tile;
    # cap the row tile at NR/2 so the "parallel" row axis spans both v7x TCs.
    tc1 = _col_tile(HW, p1_col_cap)
    row_cap1 = max(row_align, p1_max_elems // max(tc1, 1))
    if NR >= 2 * row_align:
        row_cap1 = min(row_cap1, max(row_align, (NR // 2) // row_align * row_align))
    tr1 = _row_tile(NR, min(row_cap1, 4096), row_align)
    grid1 = (pl.cdiv(NR, tr1), pl.cdiv(HW, tc1))
    mask_cols = (HW % tc1) != 0

    mom_kernel = functools.partial(_row_moments_kernel, hw=HW, tc=tc1, mask_cols=mask_cols)
    cost1 = pl.CostEstimate(flops=3 * NR * HW, transcendentals=0,
                            bytes_accessed=NR * HW * itemsize + 2 * NR * 4)
    row_sum, row_sq = pl.pallas_call(
        mom_kernel,
        out_shape=(jax.ShapeDtypeStruct((NR, 1), f32),
                   jax.ShapeDtypeStruct((NR, 1), f32)),
        grid=grid1,
        in_specs=[pl.BlockSpec((tr1, tc1), lambda i, j: (i, j))],
        out_specs=(pl.BlockSpec((tr1, 1), lambda i, j: (i, 0)),
                   pl.BlockSpec((tr1, 1), lambda i, j: (i, 0))),
        compiler_params=pltpu.CompilerParams(
            dimension_semantics=("parallel", "arbitrary"),
            vmem_limit_bytes=_VMEM_LIMIT),
        cost_estimate=cost1,
    )(x2)

    # Tiny O(N*C) glue: branch statistics -> per-(n,c) A, B (variances clamped >= 0).
    sums = row_sum.reshape(N, C)
    sqs = row_sq.reshape(N, C)

    bn_cnt = f32(N * HW)
    bn_mean = sums.sum(axis=0) / bn_cnt                                  # (C,)
    bn_var = jnp.maximum(sqs.sum(axis=0) / bn_cnt - bn_mean * bn_mean, 0.0)
    bn_inv = jax.lax.rsqrt(bn_var + EPS)

    ln_cnt = f32(C * HW)
    ln_mean = sums.sum(axis=1) / ln_cnt                                  # (N,)
    ln_var = jnp.maximum(sqs.sum(axis=1) / ln_cnt - ln_mean * ln_mean, 0.0)
    ln_inv = jax.lax.rsqrt(ln_var + EPS)

    gn_cnt = f32(cg * HW)
    g_mean = sums.reshape(N, G, cg).sum(axis=2) / gn_cnt                 # (N, G)
    g_var = jnp.maximum(sqs.reshape(N, G, cg).sum(axis=2) / gn_cnt - g_mean * g_mean, 0.0)
    g_inv = jax.lax.rsqrt(g_var + EPS)
    gn_mean_c = jnp.repeat(g_mean, cg, axis=1)                           # (N, C)
    gn_inv_c = jnp.repeat(g_inv, cg, axis=1)                             # (N, C)

    A = (bnw * bn_inv)[None, :] + lnw[None, :] * ln_inv[:, None] + gnw[None, :] * gn_inv_c
    B = ((bnb - bnw * bn_mean * bn_inv)[None, :]
         + (lnb[None, :] - lnw[None, :] * ln_mean[:, None] * ln_inv[:, None])
         + (gnb[None, :] - gnw[None, :] * gn_mean_c * gn_inv_c))
    a2 = A.reshape(NR, 1).astype(f32)
    b2 = B.reshape(NR, 1).astype(f32)

    # Pass 2: out = x*A + B, fully parallel, pipelined, lane-dense output.
    tc2 = _col_tile(HW, p2_col_cap)
    row_cap2 = max(row_align, p2_max_elems // max(tc2, 1))
    tr2 = _row_tile(NR, min(row_cap2, 4096), row_align)
    grid2 = (pl.cdiv(NR, tr2), pl.cdiv(HW, tc2))

    cost2 = pl.CostEstimate(flops=2 * NR * HW, transcendentals=0,
                            bytes_accessed=2 * NR * HW * itemsize + 2 * NR * 4)
    out2 = pl.pallas_call(
        _apply_affine_kernel,
        out_shape=jax.ShapeDtypeStruct((NR, HW), x.dtype),
        grid=grid2,
        in_specs=[pl.BlockSpec((tr2, tc2), lambda i, j: (i, j)),
                  pl.BlockSpec((tr2, 1), lambda i, j: (i, 0)),
                  pl.BlockSpec((tr2, 1), lambda i, j: (i, 0))],
        out_specs=pl.BlockSpec((tr2, tc2), lambda i, j: (i, j)),
        compiler_params=pltpu.CompilerParams(
            dimension_semantics=("parallel", "parallel"),
            vmem_limit_bytes=_VMEM_LIMIT),
        cost_estimate=cost2,
    )(x2, a2, b2)

    return out2.reshape(N, C, H, W)


# ---------------------------------------------------------------------------
# Pure-JAX reference of the PyTorch forward (training-mode BatchNorm).
# ---------------------------------------------------------------------------
def _reference(x, arch_weights, bn_w, bn_b, ln_w, ln_b, gn_w, gn_b):
    N, C, H, W = x.shape
    xf = x.astype(jnp.float32)
    w = jax.nn.softmax(arch_weights.astype(jnp.float32), axis=0)

    m = xf.mean(axis=(0, 2, 3), keepdims=True)
    v = xf.var(axis=(0, 2, 3), keepdims=True)
    bn = (xf - m) / jnp.sqrt(v + EPS) * bn_w.reshape(1, C, 1, 1) + bn_b.reshape(1, C, 1, 1)

    m = xf.mean(axis=(1, 2, 3), keepdims=True)
    v = xf.var(axis=(1, 2, 3), keepdims=True)
    ln = (xf - m) / jnp.sqrt(v + EPS) * ln_w.reshape(1, C, 1, 1) + ln_b.reshape(1, C, 1, 1)

    G = min(32, C)
    xg = xf.reshape(N, G, C // G, H, W)
    m = xg.mean(axis=(2, 3, 4), keepdims=True)
    v = xg.var(axis=(2, 3, 4), keepdims=True)
    gn = ((xg - m) / jnp.sqrt(v + EPS)).reshape(N, C, H, W)
    gn = gn * gn_w.reshape(1, C, 1, 1) + gn_b.reshape(1, C, 1, 1)

    return (w[0] * bn + w[1] * ln + w[2] * gn).astype(x.dtype)


def _check(out, ref, tag):
    out = jax.block_until_ready(out)
    assert out.shape == ref.shape and out.dtype == ref.dtype
    err = float(jnp.max(jnp.abs(out.astype(jnp.float32) - ref.astype(jnp.float32))))
    assert err < 2e-3, f"{tag}: max abs err = {err}"


if __name__ == "__main__":
    key = jax.random.PRNGKey(0)

    def make_case(key, N, C, H, W):
        ks = jax.random.split(key, 9)
        x = jax.random.normal(ks[0], (N, C, H, W), jnp.float32) * 1.5 + 0.5
        arch = jax.random.normal(ks[1], (3,), jnp.float32)
        bn_w = 1.0 + 0.1 * jax.random.normal(ks[2], (C,), jnp.float32)
        bn_b = 0.1 * jax.random.normal(ks[3], (C,), jnp.float32)
        ln_w = 1.0 + 0.1 * jax.random.normal(ks[4], (C,), jnp.float32)
        ln_b = 0.1 * jax.random.normal(ks[5], (C,), jnp.float32)
        gn_w = 1.0 + 0.1 * jax.random.normal(ks[6], (C,), jnp.float32)
        gn_b = 0.1 * jax.random.normal(ks[7], (C,), jnp.float32)
        return x, arch, (bn_w, bn_b, ln_w, ln_b, gn_w, gn_b)

    k1, k2 = jax.random.split(key)

    # Case 1: module-scale shape -> fused resident-x path; also force two-pass path.
    x, arch, params = make_case(k1, 2, 4, 16, 16)
    ref = jax.block_until_ready(_reference(x, arch, *params))
    _check(mixed_normalization_2d(x, arch, *params), ref, "fused")
    _check(mixed_normalization_2d(x, arch, *params, fused_max_f32_bytes=0), ref, "two-pass")

    # Case 2: odd (non-8/128-multiple) dims; tiny forced tiles exercise cdiv grids,
    # padded edge blocks, and the pass-1 column masking.
    x, arch, params = make_case(k2, 2, 6, 15, 20)
    ref = jax.block_until_ready(_reference(x, arch, *params))
    _check(mixed_normalization_2d(x, arch, *params), ref, "fused-odd")
    _check(mixed_normalization_2d(x, arch, *params, fused_max_f32_bytes=0,
                                  p1_col_cap=128, p2_col_cap=128,
                                  p1_max_elems=1024, p2_max_elems=1024),
           ref, "two-pass-masked")

    print("KERNEL_OK")
</pallas_src>

<mosaic_0001>
module attributes {stable_mosaic.version = 11 : i64} {
  func.func @_fused_kernel(%arg0: i32, %arg1: memref<2x4x1x256xf32, #tpu.memory_space<vmem>>, %arg2: memref<1x4x1x1xf32, #tpu.memory_space<vmem>>, %arg3: memref<1x4x1x1xf32, #tpu.memory_space<vmem>>, %arg4: memref<1x4x1x1xf32, #tpu.memory_space<vmem>>, %arg5: memref<1x4x1x1xf32, #tpu.memory_space<vmem>>, %arg6: memref<1x4x1x1xf32, #tpu.memory_space<vmem>>, %arg7: memref<1x4x1x1xf32, #tpu.memory_space<vmem>>, %arg8: memref<2x4x1x256xf32, #tpu.memory_space<vmem>>) attributes {dimension_semantics = [#tpu.dimension_semantics<arbitrary>], iteration_bounds = array<i64: 1>, scalar_prefetch = 0 : i64, scratch_operands = 0 : i64, tpu.core_type = #tpu.core_type<tc>, window_params = [{pipeline_mode = #tpu.pipeline_mode<synchronous>, transform_indices = @transform_0, window_bounds = array<i64: 2, 4, 1, 256>}, {pipeline_mode = #tpu.pipeline_mode<synchronous>, transform_indices = @transform_1, window_bounds = array<i64: 1, 4, 1, 1>}, {pipeline_mode = #tpu.pipeline_mode<synchronous>, transform_indices = @transform_2, window_bounds = array<i64: 1, 4, 1, 1>}, {pipeline_mode = #tpu.pipeline_mode<synchronous>, transform_indices = @transform_3, window_bounds = array<i64: 1, 4, 1, 1>}, {pipeline_mode = #tpu.pipeline_mode<synchronous>, transform_indices = @transform_4, window_bounds = array<i64: 1, 4, 1, 1>}, {pipeline_mode = #tpu.pipeline_mode<synchronous>, transform_indices = @transform_5, window_bounds = array<i64: 1, 4, 1, 1>}, {pipeline_mode = #tpu.pipeline_mode<synchronous>, transform_indices = @transform_6, window_bounds = array<i64: 1, 4, 1, 1>}, {pipeline_mode = #tpu.pipeline_mode<synchronous>, transform_indices = @transform_7, window_bounds = array<i64: 2, 4, 1, 256>}]} {
    %c0 = arith.constant 0 : index
    %c0_0 = arith.constant 0 : index
    %c0_1 = arith.constant 0 : index
    %c0_2 = arith.constant 0 : index
    %0 = vector.load %arg1[%c0, %c0_0, %c0_1, %c0_2] : memref<2x4x1x256xf32, #tpu.memory_space<vmem>>, vector<2x4x1x256xf32>
    %cst = arith.constant dense<0.000000e+00> : vector<2x4x1xf32>
    %1 = vector.multi_reduction <add>, %0, %cst [3] : vector<2x4x1x256xf32> to vector<2x4x1xf32>
    %2 = vector.shape_cast %1 : vector<2x4x1xf32> to vector<2x4x1x1xf32>
    %3 = arith.mulf %0, %0 : vector<2x4x1x256xf32>
    %cst_3 = arith.constant dense<0.000000e+00> : vector<2x4x1xf32>
    %4 = vector.multi_reduction <add>, %3, %cst_3 [3] : vector<2x4x1x256xf32> to vector<2x4x1xf32>
    %5 = vector.shape_cast %4 : vector<2x4x1xf32> to vector<2x4x1x1xf32>
    %cst_4 = arith.constant dense<0.000000e+00> : vector<2x4x1xf32>
    %6 = vector.multi_reduction <add>, %2, %cst_4 [2] : vector<2x4x1x1xf32> to vector<2x4x1xf32>
    %7 = vector.shape_cast %6 : vector<2x4x1xf32> to vector<2x4x1x1xf32>
    %cst_5 = arith.constant dense<0.000000e+00> : vector<2x4x1xf32>
    %8 = vector.multi_reduction <add>, %5, %cst_5 [2] : vector<2x4x1x1xf32> to vector<2x4x1xf32>
    %9 = vector.shape_cast %8 : vector<2x4x1xf32> to vector<2x4x1x1xf32>
    %cst_6 = arith.constant 2.560000e+02 : f32
    %10 = vector.broadcast %cst_6 : f32 to vector<2x4x1x1xf32>
    %11 = arith.divf %7, %10 : vector<2x4x1x1xf32>
    %cst_7 = arith.constant 2.560000e+02 : f32
    %12 = vector.broadcast %cst_7 : f32 to vector<2x4x1x1xf32>
    %13 = arith.divf %9, %12 : vector<2x4x1x1xf32>
    %14 = arith.mulf %11, %11 : vector<2x4x1x1xf32>
    %15 = arith.subf %13, %14 : vector<2x4x1x1xf32>
    %cst_8 = arith.constant 0.000000e+00 : f32
    %16 = vector.broadcast %cst_8 : f32 to vector<2x4x1x1xf32>
    %17 = arith.maximumf %15, %16 : vector<2x4x1x1xf32>
    %cst_9 = arith.constant 9.99999974E-6 : f32
    %18 = vector.broadcast %cst_9 : f32 to vector<2x4x1x1xf32>
    %19 = arith.addf %17, %18 : vector<2x4x1x1xf32>
    %20 = math.rsqrt %19 : vector<2x4x1x1xf32>
    %cst_10 = arith.constant dense<0.000000e+00> : vector<2x1x1xf32>
    %21 = vector.multi_reduction <add>, %7, %cst_10 [1] : vector<2x4x1x1xf32> to vector<2x1x1xf32>
    %22 = vector.shape_cast %21 : vector<2x1x1xf32> to vector<2x1x1x1xf32>
    %cst_11 = arith.constant dense<0.000000e+00> : vector<2x1x1xf32>
    %23 = vector.multi_reduction <add>, %9, %cst_11 [1] : vector<2x4x1x1xf32> to vector<2x1x1xf32>
    %24 = vector.shape_cast %23 : vector<2x1x1xf32> to vector<2x1x1x1xf32>
    %cst_12 = arith.constant 1.024000e+03 : f32
    %25 = vector.broadcast %cst_12 : f32 to vector<2x1x1x1xf32>
    %26 = arith.divf %22, %25 : vector<2x1x1x1xf32>
    %cst_13 = arith.constant 1.024000e+03 : f32
    %27 = vector.broadcast %cst_13 : f32 to vector<2x1x1x1xf32>
    %28 = arith.divf %24, %27 : vector<2x1x1x1xf32>
    %29 = arith.mulf %26, %26 : vector<2x1x1x1xf32>
    %30 = arith.subf %28, %29 : vector<2x1x1x1xf32>
    %cst_14 = arith.constant 0.000000e+00 : f32
    %31 = vector.broadcast %cst_14 : f32 to vector<2x1x1x1xf32>
    %32 = arith.maximumf %30, %31 : vector<2x1x1x1xf32>
    %cst_15 = arith.constant 9.99999974E-6 : f32
    %33 = vector.broadcast %cst_15 : f32 to vector<2x1x1x1xf32>
    %34 = arith.addf %32, %33 : vector<2x1x1x1xf32>
    %35 = math.rsqrt %34 : vector<2x1x1x1xf32>
    %cst_16 = arith.constant dense<0.000000e+00> : vector<4x1x1xf32>
    %36 = vector.multi_reduction <add>, %2, %cst_16 [0] : vector<2x4x1x1xf32> to vector<4x1x1xf32>
    %37 = vector.shape_cast %36 : vector<4x1x1xf32> to vector<1x4x1x1xf32>
    %cst_17 = arith.constant dense<0.000000e+00> : vector<4x1x1xf32>
    %38 = vector.multi_reduction <add>, %5, %cst_17 [0] : vector<2x4x1x1xf32> to vector<4x1x1xf32>
    %39 = vector.shape_cast %38 : vector<4x1x1xf32> to vector<1x4x1x1xf32>
    %cst_18 = arith.constant 5.120000e+02 : f32
    %40 = vector.broadcast %cst_18 : f32 to vector<1x4x1x1xf32>
    %41 = arith.divf %37, %40 : vector<1x4x1x1xf32>
    %cst_19 = arith.constant 5.120000e+02 : f32
    %42 = vector.broadcast %cst_19 : f32 to vector<1x4x1x1xf32>
    %43 = arith.divf %39, %42 : vector<1x4x1x1xf32>
    %44 = arith.mulf %41, %41 : vector<1x4x1x1xf32>
    %45 = arith.subf %43, %44 : vector<1x4x1x1xf32>
    %cst_20 = arith.constant 0.000000e+00 : f32
    %46 = vector.broadcast %cst_20 : f32 to vector<1x4x1x1xf32>
    %47 = arith.maximumf %45, %46 : vector<1x4x1x1xf32>
    %cst_21 = arith.constant 9.99999974E-6 : f32
    %48 = vector.broadcast %cst_21 : f32 to vector<1x4x1x1xf32>
    %49 = arith.addf %47, %48 : vector<1x4x1x1xf32>
    %50 = math.rsqrt %49 : vector<1x4x1x1xf32>
    %c0_22 = arith.constant 0 : index
    %c0_23 = arith.constant 0 : index
    %c0_24 = arith.constant 0 : index
    %c0_25 = arith.constant 0 : index
    %51 = vector.load %arg2[%c0_22, %c0_23, %c0_24, %c0_25] : memref<1x4x1x1xf32, #tpu.memory_space<vmem>>, vector<1x4x1x1xf32>
    %c0_26 = arith.constant 0 : index
    %c0_27 = arith.constant 0 : index
    %c0_28 = arith.constant 0 : index
    %c0_29 = arith.constant 0 : index
    %52 = vector.load %arg3[%c0_26, %c0_27, %c0_28, %c0_29] : memref<1x4x1x1xf32, #tpu.memory_space<vmem>>, vector<1x4x1x1xf32>
    %c0_30 = arith.constant 0 : index
    %c0_31 = arith.constant 0 : index
    %c0_32 = arith.constant 0 : index
    %c0_33 = arith.constant 0 : index
    %53 = vector.load %arg4[%c0_30, %c0_31, %c0_32, %c0_33] : memref<1x4x1x1xf32, #tpu.memory_space<vmem>>, vector<1x4x1x1xf32>
    %c0_34 = arith.constant 0 : index
    %c0_35 = arith.constant 0 : index
    %c0_36 = arith.constant 0 : index
    %c0_37 = arith.constant 0 : index
    %54 = vector.load %arg5[%c0_34, %c0_35, %c0_36, %c0_37] : memref<1x4x1x1xf32, #tpu.memory_space<vmem>>, vector<1x4x1x1xf32>
    %c0_38 = arith.constant 0 : index
    %c0_39 = arith.constant 0 : index
    %c0_40 = arith.constant 0 : index
    %c0_41 = arith.constant 0 : index
    %55 = vector.load %arg6[%c0_38, %c0_39, %c0_40, %c0_41] : memref<1x4x1x1xf32, #tpu.memory_space<vmem>>, vector<1x4x1x1xf32>
    %c0_42 = arith.constant 0 : index
    %c0_43 = arith.constant 0 : index
    %c0_44 = arith.constant 0 : index
    %c0_45 = arith.constant 0 : index
    %56 = vector.load %arg7[%c0_42, %c0_43, %c0_44, %c0_45] : memref<1x4x1x1xf32, #tpu.memory_space<vmem>>, vector<1x4x1x1xf32>
    %57 = arith.mulf %51, %50 : vector<1x4x1x1xf32>
    %58 = vector.broadcast %53 : vector<1x4x1x1xf32> to vector<2x4x1x1xf32>
    %59 = vector.broadcast %35 : vector<2x1x1x1xf32> to vector<2x4x1x1xf32>
    %60 = arith.mulf %58, %59 : vector<2x4x1x1xf32>
    %61 = vector.broadcast %57 : vector<1x4x1x1xf32> to vector<2x4x1x1xf32>
    %62 = arith.addf %61, %60 : vector<2x4x1x1xf32>
    %63 = vector.broadcast %55 : vector<1x4x1x1xf32> to vector<2x4x1x1xf32>
    %64 = arith.mulf %63, %20 : vector<2x4x1x1xf32>
    %65 = arith.addf %62, %64 : vector<2x4x1x1xf32>
    %66 = arith.mulf %51, %41 : vector<1x4x1x1xf32>
    %67 = arith.mulf %66, %50 : vector<1x4x1x1xf32>
    %68 = arith.subf %52, %67 : vector<1x4x1x1xf32>
    %69 = vector.broadcast %53 : vector<1x4x1x1xf32> to vector<2x4x1x1xf32>
    %70 = vector.broadcast %26 : vector<2x1x1x1xf32> to vector<2x4x1x1xf32>
    %71 = arith.mulf %69, %70 : vector<2x4x1x1xf32>
    %72 = vector.broadcast %35 : vector<2x1x1x1xf32> to vector<2x4x1x1xf32>
    %73 = arith.mulf %71, %72 : vector<2x4x1x1xf32>
    %74 = vector.broadcast %54 : vector<1x4x1x1xf32> to vector<2x4x1x1xf32>
    %75 = arith.subf %74, %73 : vector<2x4x1x1xf32>
    %76 = vector.broadcast %68 : vector<1x4x1x1xf32> to vector<2x4x1x1xf32>
    %77 = arith.addf %76, %75 : vector<2x4x1x1xf32>
    %78 = vector.broadcast %55 : vector<1x4x1x1xf32> to vector<2x4x1x1xf32>
    %79 = arith.mulf %78, %11 : vector<2x4x1x1xf32>
    %80 = arith.mulf %79, %20 : vector<2x4x1x1xf32>
    %81 = vector.broadcast %56 : vector<1x4x1x1xf32> to vector<2x4x1x1xf32>
    %82 = arith.subf %81, %80 : vector<2x4x1x1xf32>
    %83 = arith.addf %77, %82 : vector<2x4x1x1xf32>
    %84 = vector.broadcast %65 : vector<2x4x1x1xf32> to vector<2x4x1x256xf32>
    %85 = arith.mulf %0, %84 : vector<2x4x1x256xf32>
    %86 = vector.broadcast %83 : vector<2x4x1x1xf32> to vector<2x4x1x256xf32>
    %87 = arith.addf %85, %86 : vector<2x4x1x256xf32>
    %c0_46 = arith.constant 0 : index
    %c0_47 = arith.constant 0 : index
    %c0_48 = arith.constant 0 : index
    %c0_49 = arith.constant 0 : index
    %88 = vector.load %arg8[%c0_46, %c0_47, %c0_48, %c0_49] : memref<2x4x1x256xf32, #tpu.memory_space<vmem>>, vector<2x4x1x256xf32>
    tpu.vector_store %arg8[%c0_46, %c0_47, %c0_48, %c0_49], %87 {strides = array<i32>} : memref<2x4x1x256xf32, #tpu.memory_space<vmem>>, vector<2x4x1x256xf32>,
    return
  }
  func.func @transform_0(%arg0: i32) -> (i32, i32, i32, i32) {
    %c0_i32 = arith.constant 0 : i32
    %c0_i32_0 = arith.constant 0 : i32
    %c0_i32_1 = arith.constant 0 : i32
    %c0_i32_2 = arith.constant 0 : i32
    %c0_i32_3 = arith.constant 0 : i32
    return %c0_i32, %c0_i32_0, %c0_i32_1, %c0_i32_2 : i32, i32, i32, i32
  }
  func.func @transform_1(%arg0: i32) -> (i32, i32, i32, i32) {
    %c0_i32 = arith.constant 0 : i32
    %c0_i32_0 = arith.constant 0 : i32
    %c0_i32_1 = arith.constant 0 : i32
    %c0_i32_2 = arith.constant 0 : i32
    %c0_i32_3 = arith.constant 0 : i32
    return %c0_i32, %c0_i32_0, %c0_i32_1, %c0_i32_2 : i32, i32, i32, i32
  }
  func.func @transform_2(%arg0: i32) -> (i32, i32, i32, i32) {
    %c0_i32 = arith.constant 0 : i32
    %c0_i32_0 = arith.constant 0 : i32
    %c0_i32_1 = arith.constant 0 : i32
    %c0_i32_2 = arith.constant 0 : i32
    %c0_i32_3 = arith.constant 0 : i32
    return %c0_i32, %c0_i32_0, %c0_i32_1, %c0_i32_2 : i32, i32, i32, i32
  }
  func.func @transform_3(%arg0: i32) -> (i32, i32, i32, i32) {
    %c0_i32 = arith.constant 0 : i32
    %c0_i32_0 = arith.constant 0 : i32
    %c0_i32_1 = arith.constant 0 : i32
    %c0_i32_2 = arith.constant 0 : i32
    %c0_i32_3 = arith.constant 0 : i32
    return %c0_i32, %c0_i32_0, %c0_i32_1, %c0_i32_2 : i32, i32, i32, i32
  }
  func.func @transform_4(%arg0: i32) -> (i32, i32, i32, i32) {
    %c0_i32 = arith.constant 0 : i32
    %c0_i32_0 = arith.constant 0 : i32
    %c0_i32_1 = arith.constant 0 : i32
    %c0_i32_2 = arith.constant 0 : i32
    %c0_i32_3 = arith.constant 0 : i32
    return %c0_i32, %c0_i32_0, %c0_i32_1, %c0_i32_2 : i32, i32, i32, i32
  }
  func.func @transform_5(%arg0: i32) -> (i32, i32, i32, i32) {
    %c0_i32 = arith.constant 0 : i32
    %c0_i32_0 = arith.constant 0 : i32
    %c0_i32_1 = arith.constant 0 : i32
    %c0_i32_2 = arith.constant 0 : i32
    %c0_i32_3 = arith.constant 0 : i32
    return %c0_i32, %c0_i32_0, %c0_i32_1, %c0_i32_2 : i32, i32, i32, i32
  }
  func.func @transform_6(%arg0: i32) -> (i32, i32, i32, i32) {
    %c0_i32 = arith.constant 0 : i32
    %c0_i32_0 = arith.constant 0 : i32
    %c0_i32_1 = arith.constant 0 : i32
    %c0_i32_2 = arith.constant 0 : i32
    %c0_i32_3 = arith.constant 0 : i32
    return %c0_i32, %c0_i32_0, %c0_i32_1, %c0_i32_2 : i32, i32, i32, i32
  }
  func.func @transform_7(%arg0: i32) -> (i32, i32, i32, i32) {
    %c0_i32 = arith.constant 0 : i32
    %c0_i32_0 = arith.constant 0 : i32
    %c0_i32_1 = arith.constant 0 : i32
    %c0_i32_2 = arith.constant 0 : i32
    %c0_i32_3 = arith.constant 0 : i32
    return %c0_i32, %c0_i32_0, %c0_i32_1, %c0_i32_2 : i32, i32, i32, i32
  }
}

</mosaic_0001>

<llo_original>
// kernel: tpu_custom_call.1
$region0: #{tpu_custom_call.1}
  #allocation0 [shape = 'u32[]', space=smem, size = 0x4, offset = 0x4, fixed_abs, tag = 'smem constant byte address 0x4 - core index']
  #allocation1 [shape = 'u32[144,128]{1,0:T(1,128)}', space=vmem, size = 0x12000, scoped, tag = 'internal scratch']
  %s0 = inlined_call_operand.vmem [shape: f32[2,4,1,256], index: 0, kind: input, shape index: {}]
  %s1 = inlined_call_operand.vmem [shape: f32[1,4,1,1], index: 1, kind: input, shape index: {}]
  %s2 = inlined_call_operand.vmem [shape: f32[1,4,1,1], index: 2, kind: input, shape index: {}]
  %s3 = inlined_call_operand.vmem [shape: f32[1,4,1,1], index: 3, kind: input, shape index: {}]
  %s4 = inlined_call_operand.vmem [shape: f32[1,4,1,1], index: 4, kind: input, shape index: {}]
  %s5 = inlined_call_operand.vmem [shape: f32[1,4,1,1], index: 5, kind: input, shape index: {}]
  %s6 = inlined_call_operand.vmem [shape: f32[1,4,1,1], index: 6, kind: input, shape index: {}]
  %s7 = inlined_call_operand.hbm [shape: f32[2,4,1,256], index: 7, kind: output, shape index: {}]
  %s8 = sld [smem:[#allocation0]]
  $region38: #{tpu_custom_call.1} parent=0
    _
  %s10 = ssub.s32 1, %s8
  %s11 = scalar_select 0, %s10, %s8
  $region1: #{tpu_custom_call.1} parent=0
    #allocation2 [shape = 'u8[8192]{0}', space=vmem, size = 0x2000, scoped, tag = 'output window, operand 0, single buffered']
    #allocation3 [shape = 's32[1]{0}', space=sflag, size = 0x4, scoped, tag = 'scoped memory for tpu_custom_call.1']
    %12 = vsyncpa [#allocation3], 0
    // Predicated region
    $region2: #{tpu_custom_call.1} parent=1 // pred_check
      _
    $region3: #{tpu_custom_call.1} parent=1 // pred_check_branch
      %14 = sbr.rel (0) target = $region5
    $region4: #{tpu_custom_call.1} parent=1 // pred_region
      _
    $region5: #{tpu_custom_call.1} parent=1 // pred_fallthru
      _
    // Predicated region
    $region6: #{tpu_custom_call.1} parent=1 // pred_check
      _
    $region7: #{tpu_custom_call.1} parent=1 // pred_check_branch
      %16 = sbr.rel (0) target = $region9
    $region8: #{tpu_custom_call.1} parent=1 // pred_region
      _
    $region9: #{tpu_custom_call.1} parent=1 // pred_fallthru
      _
    // Predicated region
    $region10: #{tpu_custom_call.1} parent=1 // pred_check
      _
    $region11: #{tpu_custom_call.1} parent=1 // pred_check_branch
      %18 = sbr.rel (0) target = $region13
    $region12: #{tpu_custom_call.1} parent=1 // pred_region
      _
    $region13: #{tpu_custom_call.1} parent=1 // pred_fallthru
      _
    // Predicated region
    $region14: #{tpu_custom_call.1} parent=1 // pred_check
      _
    $region15: #{tpu_custom_call.1} parent=1 // pred_check_branch
      %20 = sbr.rel (0) target = $region17
    $region16: #{tpu_custom_call.1} parent=1 // pred_region
      _
    $region17: #{tpu_custom_call.1} parent=1 // pred_fallthru
      _
    // Predicated region
    $region18: #{tpu_custom_call.1} parent=1 // pred_check
      _
    $region19: #{tpu_custom_call.1} parent=1 // pred_check_branch
      %22 = sbr.rel (0) target = $region21
    $region20: #{tpu_custom_call.1} parent=1 // pred_region
      _
    $region21: #{tpu_custom_call.1} parent=1 // pred_fallthru
      _
    // Predicated region
    $region22: #{tpu_custom_call.1} parent=1 // pred_check
      _
    $region23: #{tpu_custom_call.1} parent=1 // pred_check_branch
      %24 = sbr.rel (0) target = $region25
    $region24: #{tpu_custom_call.1} parent=1 // pred_region
      _
    $region25: #{tpu_custom_call.1} parent=1 // pred_fallthru
      _
    // Predicated region
    $region26: #{tpu_custom_call.1} parent=1 // pred_check
      _
    $region27: #{tpu_custom_call.1} parent=1 // pred_check_branch
      %26 = sbr.rel (0) target = $region29
    $region28: #{tpu_custom_call.1} parent=1 // pred_region
      _
    $region29: #{tpu_custom_call.1} parent=1 // pred_fallthru
      _
    %v27 = vld [vmem:[%s0] sm:$0x3]
    %v28 = vld [vmem:[%s0 + $0x2] sm:$0x3]
    %v29 = vld [vmem:[%s0 + $0x4] sm:$0x3]
    %v30 = vld [vmem:[%s0 + $0x6] sm:$0x3]
    %v31 = vld [vmem:[%s0 + $0x8] sm:$0x3]
    %v32 = vld [vmem:[%s0 + $0xa] sm:$0x3]
    %v33 = vld [vmem:[%s0 + $0xc] sm:$0x3]
    %v34 = vld [vmem:[%s0 + $0xe] sm:$0x3]
    %v43 = vlaneseq
    %v44 = vshrl.u32 %v43, 7
    %v45 = vsub.s32 0, %v44
    %v46 = vrot.slane %v27, %v45
    %v47 = vlaneseq
    %v48 = vshrl.u32 %v47, 7
    %v49 = vsub.s32 1, %v48
    %v50 = vrot.slane %v27, %v49
    %v51 = vlaneseq
    %v52 = vshrl.u32 %v51, 7
    %v53 = vsub.s32 0, %v52
    %v54 = vrot.slane %v28, %v53
    %v55 = vlaneseq
    %v56 = vshrl.u32 %v55, 7
    %v57 = vsub.s32 1, %v56
    %v58 = vrot.slane %v28, %v57
    %v59 = vlaneseq
    %v60 = vshrl.u32 %v59, 7
    %v61 = vsub.s32 0, %v60
    %v62 = vrot.slane %v29, %v61
    %v63 = vlaneseq
    %v64 = vshrl.u32 %v63, 7
    %v65 = vsub.s32 1, %v64
    %v66 = vrot.slane %v29, %v65
    %v67 = vlaneseq
    %v68 = vshrl.u32 %v67, 7
    %v69 = vsub.s32 0, %v68
    %v70 = vrot.slane %v30, %v69
    %v71 = vlaneseq
    %v72 = vshrl.u32 %v71, 7
    %v73 = vsub.s32 1, %v72
    %v74 = vrot.slane %v30, %v73
    %v75 = vlaneseq
    %v76 = vshrl.u32 %v75, 7
    %v77 = vsub.s32 0, %v76
    %v78 = vrot.slane %v31, %v77
    %v79 = vlaneseq
    %v80 = vshrl.u32 %v79, 7
    %v81 = vsub.s32 1, %v80
    %v82 = vrot.slane %v31, %v81
    %v83 = vlaneseq
    %v84 = vshrl.u32 %v83, 7
    %v85 = vsub.s32 0, %v84
    %v86 = vrot.slane %v32, %v85
    %v87 = vlaneseq
    %v88 = vshrl.u32 %v87, 7
    %v89 = vsub.s32 1, %v88
    %v90 = vrot.slane %v32, %v89
    %v91 = vlaneseq
    %v92 = vshrl.u32 %v91, 7
    %v93 = vsub.s32 0, %v92
    %v94 = vrot.slane %v33, %v93
    %v95 = vlaneseq
    %v96 = vshrl.u32 %v95, 7
    %v97 = vsub.s32 1, %v96
    %v98 = vrot.slane %v33, %v97
    %v99 = vlaneseq
    %v100 = vshrl.u32 %v99, 7
    %v101 = vsub.s32 0, %v100
    %v102 = vrot.slane %v34, %v101
    %v103 = vlaneseq
    %v104 = vshrl.u32 %v103, 7
    %v105 = vsub.s32 1, %v104
    %v106 = vrot.slane %v34, %v105
    %vm123 = vcmask 1040384
    %v124 = vsel %vm123, %v46, 0.0
    %v125 = vsel %vm123, %v50, 0.0
    %v126 = vadd.f32 %v124, %v125
    %127 = vadd.xlane.f32.xlu0 %v126
    %v128 = vpop.xlane.xlu0 %127
    %v129 = vsel %vm123, %v54, 0.0
    %v130 = vsel %vm123, %v58, 0.0
    %v131 = vadd.f32 %v129, %v130
    %132 = vadd.xlane.f32.xlu0 %v131
    %v133 = vpop.xlane.xlu0 %132
    %v134 = vsel %vm123, %v62, 0.0
    %v135 = vsel %vm123, %v66, 0.0
    %v136 = vadd.f32 %v134, %v135
    %137 = vadd.xlane.f32.xlu0 %v136
    %v138 = vpop.xlane.xlu0 %137
    %v139 = vsel %vm123, %v70, 0.0
    %v140 = vsel %vm123, %v74, 0.0
    %v141 = vadd.f32 %v139, %v140
    %142 = vadd.xlane.f32.xlu0 %v141
    %v143 = vpop.xlane.xlu0 %142
    %v144 = vsel %vm123, %v78, 0.0
    %v145 = vsel %vm123, %v82, 0.0
    %v146 = vadd.f32 %v144, %v145
    %147 = vadd.xlane.f32.xlu0 %v146
    %v148 = vpop.xlane.xlu0 %147
    %v149 = vsel %vm123, %v86, 0.0
    %v150 = vsel %vm123, %v90, 0.0
    %v151 = vadd.f32 %v149, %v150
    %152 = vadd.xlane.f32.xlu0 %v151
    %v153 = vpop.xlane.xlu0 %152
    %v154 = vsel %vm123, %v94, 0.0
    %v155 = vsel %vm123, %v98, 0.0
    %v156 = vadd.f32 %v154, %v155
    %157 = vadd.xlane.f32.xlu0 %v156
    %v158 = vpop.xlane.xlu0 %157
    %v159 = vsel %vm123, %v102, 0.0
    %v160 = vsel %vm123, %v106, 0.0
    %v161 = vadd.f32 %v159, %v160
    %162 = vadd.xlane.f32.xlu0 %v161
    %v163 = vpop.xlane.xlu0 %162
    %v164 = vmul.f32 %v27, %v27
    %v165 = vmul.f32 %v28, %v28
    %v166 = vmul.f32 %v29, %v29
    %v167 = vmul.f32 %v30, %v30
    %v168 = vmul.f32 %v31, %v31
    %v169 = vmul.f32 %v32, %v32
    %v170 = vmul.f32 %v33, %v33
    %v171 = vmul.f32 %v34, %v34
    %v180 = vlaneseq
    %v181 = vshrl.u32 %v180, 7
    %v182 = vsub.s32 0, %v181
    %v183 = vrot.slane %v164, %v182
    %v184 = vlaneseq
    %v185 = vshrl.u32 %v184, 7
    %v186 = vsub.s32 1, %v185
    %v187 = vrot.slane %v164, %v186
    %v188 = vlaneseq
    %v189 = vshrl.u32 %v188, 7
    %v190 = vsub.s32 0, %v189
    %v191 = vrot.slane %v165, %v190
    %v192 = vlaneseq
    %v193 = vshrl.u32 %v192, 7
    %v194 = vsub.s32 1, %v193
    %v195 = vrot.slane %v165, %v194
    %v196 = vlaneseq
    %v197 = vshrl.u32 %v196, 7
    %v198 = vsub.s32 0, %v197
    %v199 = vrot.slane %v166, %v198
    %v200 = vlaneseq
    %v201 = vshrl.u32 %v200, 7
    %v202 = vsub.s32 1, %v201
    %v203 = vrot.slane %v166, %v202
    %v204 = vlaneseq
    %v205 = vshrl.u32 %v204, 7
    %v206 = vsub.s32 0, %v205
    %v207 = vrot.slane %v167, %v206
    %v208 = vlaneseq
    %v209 = vshrl.u32 %v208, 7
    %v210 = vsub.s32 1, %v209
    %v211 = vrot.slane %v167, %v210
    %v212 = vlaneseq
    %v213 = vshrl.u32 %v212, 7
    %v214 = vsub.s32 0, %v213
    %v215 = vrot.slane %v168, %v214
    %v216 = vlaneseq
    %v217 = vshrl.u32 %v216, 7
    %v218 = vsub.s32 1, %v217
    %v219 = vrot.slane %v168, %v218
    %v220 = vlaneseq
    %v221 = vshrl.u32 %v220, 7
    %v222 = vsub.s32 0, %v221
    %v223 = vrot.slane %v169, %v222
    %v224 = vlaneseq
    %v225 = vshrl.u32 %v224, 7
    %v226 = vsub.s32 1, %v225
    %v227 = vrot.slane %v169, %v226
    %v228 = vlaneseq
    %v229 = vshrl.u32 %v228, 7
    %v230 = vsub.s32 0, %v229
    %v231 = vrot.slane %v170, %v230
    %v232 = vlaneseq
    %v233 = vshrl.u32 %v232, 7
    %v234 = vsub.s32 1, %v233
    %v235 = vrot.slane %v170, %v234
    %v236 = vlaneseq
    %v237 = vshrl.u32 %v236, 7
    %v238 = vsub.s32 0, %v237
    %v239 = vrot.slane %v171, %v238
    %v240 = vlaneseq
    %v241 = vshrl.u32 %v240, 7
    %v242 = vsub.s32 1, %v241
    %v243 = vrot.slane %v171, %v242
    %v260 = vsel %vm123, %v183, 0.0
    %v261 = vsel %vm123, %v187, 0.0
    %v262 = vadd.f32 %v260, %v261
    %263 = vadd.xlane.f32.xlu0 %v262
    %v264 = vpop.xlane.xlu0 %263
    %v265 = vsel %vm123, %v191, 0.0
    %v266 = vsel %vm123, %v195, 0.0
    %v267 = vadd.f32 %v265, %v266
    %268 = vadd.xlane.f32.xlu0 %v267
    %v269 = vpop.xlane.xlu0 %268
    %v270 = vsel %vm123, %v199, 0.0
    %v271 = vsel %vm123, %v203, 0.0
    %v272 = vadd.f32 %v270, %v271
    %273 = vadd.xlane.f32.xlu0 %v272
    %v274 = vpop.xlane.xlu0 %273
    %v275 = vsel %vm123, %v207, 0.0
    %v276 = vsel %vm123, %v211, 0.0
    %v277 = vadd.f32 %v275, %v276
    %278 = vadd.xlane.f32.xlu0 %v277
    %v279 = vpop.xlane.xlu0 %278
    %v280 = vsel %vm123, %v215, 0.0
    %v281 = vsel %vm123, %v219, 0.0
    %v282 = vadd.f32 %v280, %v281
    %283 = vadd.xlane.f32.xlu0 %v282
    %v284 = vpop.xlane.xlu0 %283
    %v285 = vsel %vm123, %v223, 0.0
    %v286 = vsel %vm123, %v227, 0.0
    %v287 = vadd.f32 %v285, %v286
    %288 = vadd.xlane.f32.xlu0 %v287
    %v289 = vpop.xlane.xlu0 %288
    %v290 = vsel %vm123, %v231, 0.0
    %v291 = vsel %vm123, %v235, 0.0
    %v292 = vadd.f32 %v290, %v291
    %293 = vadd.xlane.f32.xlu0 %v292
    %v294 = vpop.xlane.xlu0 %293
    %v295 = vsel %vm123, %v239, 0.0
    %v296 = vsel %vm123, %v243, 0.0
    %v297 = vadd.f32 %v295, %v296
    %298 = vadd.xlane.f32.xlu0 %v297
    %v299 = vpop.xlane.xlu0 %298
    %v300 = vadd.f32 %v128, 0.0
    %v301 = vadd.f32 %v133, 0.0
    %v302 = vadd.f32 %v138, 0.0
    %v303 = vadd.f32 %v143, 0.0
    %v304 = vadd.f32 %v148, 0.0
    %v305 = vadd.f32 %v153, 0.0
    %v306 = vadd.f32 %v158, 0.0
    %v307 = vadd.f32 %v163, 0.0
    %v308 = vadd.f32 %v264, 0.0
    %v309 = vadd.f32 %v269, 0.0
    %v310 = vadd.f32 %v274, 0.0
    %v311 = vadd.f32 %v279, 0.0
    %v312 = vadd.f32 %v284, 0.0
    %v313 = vadd.f32 %v289, 0.0
    %v314 = vadd.f32 %v294, 0.0
    %v315 = vadd.f32 %v299, 0.0
    %v316 = vrcp.pop 256.0
    %v317 = vmul.f32 %v300, %v316
    %v318 = vmul.f32 %v301, %v316
    %v319 = vmul.f32 %v302, %v316
    %v320 = vmul.f32 %v303, %v316
    %v321 = vmul.f32 %v304, %v316
    %v322 = vmul.f32 %v305, %v316
    %v323 = vmul.f32 %v306, %v316
    %v324 = vmul.f32 %v307, %v316
    %v325 = vmul.f32 %v308, %v316
    %v326 = vmul.f32 %v309, %v316
    %v327 = vmul.f32 %v310, %v316
    %v328 = vmul.f32 %v311, %v316
    %v329 = vmul.f32 %v312, %v316
    %v330 = vmul.f32 %v313, %v316
    %v331 = vmul.f32 %v314, %v316
    %v332 = vmul.f32 %v315, %v316
    %v333 = vmul.f32 %v317, %v317
    %v334 = vmul.f32 %v318, %v318
    %v335 = vmul.f32 %v319, %v319
    %v336 = vmul.f32 %v320, %v320
    %v337 = vmul.f32 %v321, %v321
    %v338 = vmul.f32 %v322, %v322
    %v339 = vmul.f32 %v323, %v323
    %v340 = vmul.f32 %v324, %v324
    %v341 = vsub.f32 %v325, %v333
    %v342 = vsub.f32 %v326, %v334
    %v343 = vsub.f32 %v327, %v335
    %v344 = vsub.f32 %v328, %v336
    %v345 = vsub.f32 %v329, %v337
    %v346 = vsub.f32 %v330, %v338
    %v347 = vsub.f32 %v331, %v339
    %v348 = vsub.f32 %v332, %v340
    %v349 = vmax.f32 %v341, 0.0
    %v350 = vmax.f32 %v342, 0.0
    %v351 = vmax.f32 %v343, 0.0
    %v352 = vmax.f32 %v344, 0.0
    %v353 = vmax.f32 %v345, 0.0
    %v354 = vmax.f32 %v346, 0.0
    %v355 = vmax.f32 %v347, 0.0
    %v356 = vmax.f32 %v348, 0.0
    %v357 = vadd.f32 %v349, 1e-05
    %v358 = vadd.f32 %v350, 1e-05
    %v359 = vadd.f32 %v351, 1e-05
    %v360 = vadd.f32 %v352, 1e-05
    %v361 = vadd.f32 %v353, 1e-05
    %v362 = vadd.f32 %v354, 1e-05
    %v363 = vadd.f32 %v355, 1e-05
    %v364 = vadd.f32 %v356, 1e-05
    %v365 = vrsqrt.pop %v357
    %v366 = vrsqrt.pop %v358
    %v367 = vrsqrt.pop %v359
    %v368 = vrsqrt.pop %v360
    %v369 = vrsqrt.pop %v361
    %v370 = vrsqrt.pop %v362
    %v371 = vrsqrt.pop %v363
    %v372 = vrsqrt.pop %v364
    %v373 = vsel %vm123, %v300, 0.0
    %v374 = vsel %vm123, %v301, 0.0
    %v375 = vadd.f32 %v373, %v374
    %v376 = vsel %vm123, %v302, 0.0
    %v377 = vadd.f32 %v375, %v376
    %v378 = vsel %vm123, %v303, 0.0
    %v379 = vadd.f32 %v377, %v378
    %v380 = vsel %vm123, %v304, 0.0
    %v381 = vsel %vm123, %v305, 0.0
    %v382 = vadd.f32 %v380, %v381
    %v383 = vsel %vm123, %v306, 0.0
    %v384 = vadd.f32 %v382, %v383
    %v385 = vsel %vm123, %v307, 0.0
    %v386 = vadd.f32 %v384, %v385
    %v387 = vsel %vm123, %v308, 0.0
    %v388 = vsel %vm123, %v309, 0.0
    %v389 = vadd.f32 %v387, %v388
    %v390 = vsel %vm123, %v310, 0.0
    %v391 = vadd.f32 %v389, %v390
    %v392 = vsel %vm123, %v311, 0.0
    %v393 = vadd.f32 %v391, %v392
    %v394 = vsel %vm123, %v312, 0.0
    %v395 = vsel %vm123, %v313, 0.0
    %v396 = vadd.f32 %v394, %v395
    %v397 = vsel %vm123, %v314, 0.0
    %v398 = vadd.f32 %v396, %v397
    %v399 = vsel %vm123, %v315, 0.0
    %v400 = vadd.f32 %v398, %v399
    %v401 = vrcp.pop 1024.0
    %v402 = vmul.f32 %v379, %v401
    %v403 = vmul.f32 %v386, %v401
    %v404 = vmul.f32 %v393, %v401
    %v405 = vmul.f32 %v400, %v401
    %v406 = vmul.f32 %v402, %v402
    %v407 = vmul.f32 %v403, %v403
    %v408 = vsub.f32 %v404, %v406
    %v409 = vsub.f32 %v405, %v407
    %v410 = vmax.f32 %v408, 0.0
    %v411 = vmax.f32 %v409, 0.0
    %v412 = vadd.f32 %v410, 1e-05
    %v413 = vadd.f32 %v411, 1e-05
    %v414 = vrsqrt.pop %v412
    %v415 = vrsqrt.pop %v413
    %v416 = vsel %vm123, %v128, 0.0
    %v417 = vsel %vm123, %v148, 0.0
    %v418 = vadd.f32 %v416, %v417
    %v419 = vsel %vm123, %v133, 0.0
    %v420 = vsel %vm123, %v153, 0.0
    %v421 = vadd.f32 %v419, %v420
    %v422 = vsel %vm123, %v138, 0.0
    %v423 = vsel %vm123, %v158, 0.0
    %v424 = vadd.f32 %v422, %v423
    %v425 = vsel %vm123, %v143, 0.0
    %v426 = vsel %vm123, %v163, 0.0
    %v427 = vadd.f32 %v425, %v426
    %v428 = vsel %vm123, %v264, 0.0
    %v429 = vsel %vm123, %v284, 0.0
    %v430 = vadd.f32 %v428, %v429
    %v431 = vsel %vm123, %v269, 0.0
    %v432 = vsel %vm123, %v289, 0.0
    %v433 = vadd.f32 %v431, %v432
    %v434 = vsel %vm123, %v274, 0.0
    %v435 = vsel %vm123, %v294, 0.0
    %v436 = vadd.f32 %v434, %v435
    %v437 = vsel %vm123, %v279, 0.0
    %v438 = vsel %vm123, %v299, 0.0
    %v439 = vadd.f32 %v437, %v438
    %v440 = vrcp.pop 512.0
    %v441 = vmul.f32 %v418, %v440
    %v442 = vmul.f32 %v421, %v440
    %v443 = vmul.f32 %v424, %v440
    %v444 = vmul.f32 %v427, %v440
    %v445 = vmul.f32 %v430, %v440
    %v446 = vmul.f32 %v433, %v440
    %v447 = vmul.f32 %v436, %v440
    %v448 = vmul.f32 %v439, %v440
    %v449 = vmul.f32 %v441, %v441
    %v450 = vmul.f32 %v442, %v442
    %v451 = vmul.f32 %v443, %v443
    %v452 = vmul.f32 %v444, %v444
    %v453 = vsub.f32 %v445, %v449
    %v454 = vsub.f32 %v446, %v450
    %v455 = vsub.f32 %v447, %v451
    %v456 = vsub.f32 %v448, %v452
    %v457 = vmax.f32 %v453, 0.0
    %v458 = vmax.f32 %v454, 0.0
    %v459 = vmax.f32 %v455, 0.0
    %v460 = vmax.f32 %v456, 0.0
    %v461 = vadd.f32 %v457, 1e-05
    %v462 = vadd.f32 %v458, 1e-05
    %v463 = vadd.f32 %v459, 1e-05
    %v464 = vadd.f32 %v460, 1e-05
    %v465 = vrsqrt.pop %v461
    %v466 = vrsqrt.pop %v462
    %v467 = vrsqrt.pop %v463
    %v468 = vrsqrt.pop %v464
    %v469 = vld [vmem:[%s1] sm:$0x1]
    %v470 = vld [vmem:[%s1 + $0x1] sm:$0x1]
    %v471 = vld [vmem:[%s1 + $0x2] sm:$0x1]
    %v472 = vld [vmem:[%s1 + $0x3] sm:$0x1]
    %v473 = vld [vmem:[%s2] sm:$0x1]
    %v474 = vld [vmem:[%s2 + $0x1] sm:$0x1]
    %v475 = vld [vmem:[%s2 + $0x2] sm:$0x1]
    %v476 = vld [vmem:[%s2 + $0x3] sm:$0x1]
    %v477 = vld [vmem:[%s3] sm:$0x1]
    %v478 = vld [vmem:[%s3 + $0x1] sm:$0x1]
    %v479 = vld [vmem:[%s3 + $0x2] sm:$0x1]
    %v480 = vld [vmem:[%s3 + $0x3] sm:$0x1]
    %v481 = vld [vmem:[%s4] sm:$0x1]
    %v482 = vld [vmem:[%s4 + $0x1] sm:$0x1]
    %v483 = vld [vmem:[%s4 + $0x2] sm:$0x1]
    %v484 = vld [vmem:[%s4 + $0x3] sm:$0x1]
    %v485 = vld [vmem:[%s5] sm:$0x1]
    %v486 = vld [vmem:[%s5 + $0x1] sm:$0x1]
    %v487 = vld [vmem:[%s5 + $0x2] sm:$0x1]
    %v488 = vld [vmem:[%s5 + $0x3] sm:$0x1]
    %v489 = vld [vmem:[%s6] sm:$0x1]
    %v490 = vld [vmem:[%s6 + $0x1] sm:$0x1]
    %v491 = vld [vmem:[%s6 + $0x2] sm:$0x1]
    %v492 = vld [vmem:[%s6 + $0x3] sm:$0x1]
    %v493 = vmul.f32 %v469, %v465
    %v494 = vmul.f32 %v470, %v466
    %v495 = vmul.f32 %v471, %v467
    %v496 = vmul.f32 %v472, %v468
    %v497 = vmul.f32 %v477, %v414
    %v498 = vmul.f32 %v478, %v414
    %v499 = vmul.f32 %v479, %v414
    %v500 = vmul.f32 %v480, %v414
    %v501 = vmul.f32 %v477, %v415
    %v502 = vmul.f32 %v478, %v415
    %v503 = vmul.f32 %v479, %v415
    %v504 = vmul.f32 %v480, %v415
    %v505 = vadd.f32 %v493, %v497
    %v506 = vadd.f32 %v494, %v498
    %v507 = vadd.f32 %v495, %v499
    %v508 = vadd.f32 %v496, %v500
    %v509 = vadd.f32 %v493, %v501
    %v510 = vadd.f32 %v494, %v502
    %v511 = vadd.f32 %v495, %v503
    %v512 = vadd.f32 %v496, %v504
    %v513 = vmul.f32 %v485, %v365
    %v514 = vmul.f32 %v486, %v366
    %v515 = vmul.f32 %v487, %v367
    %v516 = vmul.f32 %v488, %v368
    %v517 = vmul.f32 %v485, %v369
    %v518 = vmul.f32 %v486, %v370
    %v519 = vmul.f32 %v487, %v371
    %v520 = vmul.f32 %v488, %v372
    %v521 = vadd.f32 %v505, %v513
    %v522 = vadd.f32 %v506, %v514
    %v523 = vadd.f32 %v507, %v515
    %v524 = vadd.f32 %v508, %v516
    %v525 = vadd.f32 %v509, %v517
    %v526 = vadd.f32 %v510, %v518
    %v527 = vadd.f32 %v511, %v519
    %v528 = vadd.f32 %v512, %v520
    %v529 = vmul.f32 %v469, %v441
    %v530 = vmul.f32 %v470, %v442
    %v531 = vmul.f32 %v471, %v443
    %v532 = vmul.f32 %v472, %v444
    %v533 = vmul.f32 %v529, %v465
    %v534 = vmul.f32 %v530, %v466
    %v535 = vmul.f32 %v531, %v467
    %v536 = vmul.f32 %v532, %v468
    %v537 = vsub.f32 %v473, %v533
    %v538 = vsub.f32 %v474, %v534
    %v539 = vsub.f32 %v475, %v535
    %v540 = vsub.f32 %v476, %v536
    %v541 = vmul.f32 %v477, %v402
    %v542 = vmul.f32 %v478, %v402
    %v543 = vmul.f32 %v479, %v402
    %v544 = vmul.f32 %v480, %v402
    %v545 = vmul.f32 %v477, %v403
    %v546 = vmul.f32 %v478, %v403
    %v547 = vmul.f32 %v479, %v403
    %v548 = vmul.f32 %v480, %v403
    %v549 = vmul.f32 %v541, %v414
    %v550 = vmul.f32 %v542, %v414
    %v551 = vmul.f32 %v543, %v414
    %v552 = vmul.f32 %v544, %v414
    %v553 = vmul.f32 %v545, %v415
    %v554 = vmul.f32 %v546, %v415
    %v555 = vmul.f32 %v547, %v415
    %v556 = vmul.f32 %v548, %v415
    %v557 = vsub.f32 %v481, %v549
    %v558 = vsub.f32 %v482, %v550
    %v559 = vsub.f32 %v483, %v551
    %v560 = vsub.f32 %v484, %v552
    %v561 = vsub.f32 %v481, %v553
    %v562 = vsub.f32 %v482, %v554
    %v563 = vsub.f32 %v483, %v555
    %v564 = vsub.f32 %v484, %v556
    %v565 = vadd.f32 %v537, %v557
    %v566 = vadd.f32 %v538, %v558
    %v567 = vadd.f32 %v539, %v559
    %v568 = vadd.f32 %v540, %v560
    %v569 = vadd.f32 %v537, %v561
    %v570 = vadd.f32 %v538, %v562
    %v571 = vadd.f32 %v539, %v563
    %v572 = vadd.f32 %v540, %v564
    %v573 = vmul.f32 %v485, %v317
    %v574 = vmul.f32 %v486, %v318
    %v575 = vmul.f32 %v487, %v319
    %v576 = vmul.f32 %v488, %v320
    %v577 = vmul.f32 %v485, %v321
    %v578 = vmul.f32 %v486, %v322
    %v579 = vmul.f32 %v487, %v323
    %v580 = vmul.f32 %v488, %v324
    %v581 = vmul.f32 %v573, %v365
    %v582 = vmul.f32 %v574, %v366
    %v583 = vmul.f32 %v575, %v367
    %v584 = vmul.f32 %v576, %v368
    %v585 = vmul.f32 %v577, %v369
    %v586 = vmul.f32 %v578, %v370
    %v587 = vmul.f32 %v579, %v371
    %v588 = vmul.f32 %v580, %v372
    %v589 = vsub.f32 %v489, %v581
    %v590 = vsub.f32 %v490, %v582
    %v591 = vsub.f32 %v491, %v583
    %v592 = vsub.f32 %v492, %v584
    %v593 = vsub.f32 %v489, %v585
    %v594 = vsub.f32 %v490, %v586
    %v595 = vsub.f32 %v491, %v587
    %v596 = vsub.f32 %v492, %v588
    %v597 = vadd.f32 %v565, %v589
    %v598 = vadd.f32 %v566, %v590
    %v599 = vadd.f32 %v567, %v591
    %v600 = vadd.f32 %v568, %v592
    %v601 = vadd.f32 %v569, %v593
    %v602 = vadd.f32 %v570, %v594
    %v603 = vadd.f32 %v571, %v595
    %v604 = vadd.f32 %v572, %v596
    %606 = vset.pattern.permute.xlu0 0
    %607 = vperm.xlu0 %606, %v521
    %v608 = vpop.permute.xlu0 %607
    %v610 = vlaneseq
    %v611 = vshrl.u32 %v610, 7
    %v612 = vsub.s32 0, %v611
    %v613 = vrot.slane %v608, %v612
    %615 = vset.pattern.permute.xlu0 0
    %616 = vperm.xlu0 %615, %v522
    %v617 = vpop.permute.xlu0 %616
    %v619 = vlaneseq
    %v620 = vshrl.u32 %v619, 7
    %v621 = vsub.s32 0, %v620
    %v622 = vrot.slane %v617, %v621
    %624 = vset.pattern.permute.xlu0 0
    %625 = vperm.xlu0 %624, %v523
    %v626 = vpop.permute.xlu0 %625
    %v628 = vlaneseq
    %v629 = vshrl.u32 %v628, 7
    %v630 = vsub.s32 0, %v629
    %v631 = vrot.slane %v626, %v630
    %633 = vset.pattern.permute.xlu0 0
    %634 = vperm.xlu0 %633, %v524
    %v635 = vpop.permute.xlu0 %634
    %v637 = vlaneseq
    %v638 = vshrl.u32 %v637, 7
    %v639 = vsub.s32 0, %v638
    %v640 = vrot.slane %v635, %v639
    %642 = vset.pattern.permute.xlu0 0
    %643 = vperm.xlu0 %642, %v525
    %v644 = vpop.permute.xlu0 %643
    %v646 = vlaneseq
    %v647 = vshrl.u32 %v646, 7
    %v648 = vsub.s32 0, %v647
    %v649 = vrot.slane %v644, %v648
    %651 = vset.pattern.permute.xlu0 0
    %652 = vperm.xlu0 %651, %v526
    %v653 = vpop.permute.xlu0 %652
    %v655 = vlaneseq
    %v656 = vshrl.u32 %v655, 7
    %v657 = vsub.s32 0, %v656
    %v658 = vrot.slane %v653, %v657
    %660 = vset.pattern.permute.xlu0 0
    %661 = vperm.xlu0 %660, %v527
    %v662 = vpop.permute.xlu0 %661
    %v664 = vlaneseq
    %v665 = vshrl.u32 %v664, 7
    %v666 = vsub.s32 0, %v665
    %v667 = vrot.slane %v662, %v666
    %669 = vset.pattern.permute.xlu0 0
    %670 = vperm.xlu0 %669, %v528
    %v671 = vpop.permute.xlu0 %670
    %v673 = vlaneseq
    %v674 = vshrl.u32 %v673, 7
    %v675 = vsub.s32 0, %v674
    %v676 = vrot.slane %v671, %v675
    %v677 = vmul.f32 %v27, %v613
    %v678 = vmul.f32 %v28, %v622
    %v679 = vmul.f32 %v29, %v631
    %v680 = vmul.f32 %v30, %v640
    %v681 = vmul.f32 %v31, %v649
    %v682 = vmul.f32 %v32, %v658
    %v683 = vmul.f32 %v33, %v667
    %v684 = vmul.f32 %v34, %v676
    %686 = vset.pattern.permute.xlu0 0
    %687 = vperm.xlu0 %686, %v597
    %v688 = vpop.permute.xlu0 %687
    %v690 = vlaneseq
    %v691 = vshrl.u32 %v690, 7
    %v692 = vsub.s32 0, %v691
    %v693 = vrot.slane %v688, %v692
    %695 = vset.pattern.permute.xlu0 0
    %696 = vperm.xlu0 %695, %v598
    %v697 = vpop.permute.xlu0 %696
    %v699 = vlaneseq
    %v700 = vshrl.u32 %v699, 7
    %v701 = vsub.s32 0, %v700
    %v702 = vrot.slane %v697, %v701
    %704 = vset.pattern.permute.xlu0 0
    %705 = vperm.xlu0 %704, %v599
    %v706 = vpop.permute.xlu0 %705
    %v708 = vlaneseq
    %v709 = vshrl.u32 %v708, 7
    %v710 = vsub.s32 0, %v709
    %v711 = vrot.slane %v706, %v710
    %713 = vset.pattern.permute.xlu0 0
    %714 = vperm.xlu0 %713, %v600
    %v715 = vpop.permute.xlu0 %714
    %v717 = vlaneseq
    %v718 = vshrl.u32 %v717, 7
    %v719 = vsub.s32 0, %v718
    %v720 = vrot.slane %v715, %v719
    %722 = vset.pattern.permute.xlu0 0
    %723 = vperm.xlu0 %722, %v601
    %v724 = vpop.permute.xlu0 %723
    %v726 = vlaneseq
    %v727 = vshrl.u32 %v726, 7
    %v728 = vsub.s32 0, %v727
    %v729 = vrot.slane %v724, %v728
    %731 = vset.pattern.permute.xlu0 0
    %732 = vperm.xlu0 %731, %v602
    %v733 = vpop.permute.xlu0 %732
    %v735 = vlaneseq
    %v736 = vshrl.u32 %v735, 7
    %v737 = vsub.s32 0, %v736
    %v738 = vrot.slane %v733, %v737
    %740 = vset.pattern.permute.xlu0 0
    %741 = vperm.xlu0 %740, %v603
    %v742 = vpop.permute.xlu0 %741
    %v744 = vlaneseq
    %v745 = vshrl.u32 %v744, 7
    %v746 = vsub.s32 0, %v745
    %v747 = vrot.slane %v742, %v746
    %749 = vset.pattern.permute.xlu0 0
    %750 = vperm.xlu0 %749, %v604
    %v751 = vpop.permute.xlu0 %750
    %v753 = vlaneseq
    %v754 = vshrl.u32 %v753, 7
    %v755 = vsub.s32 0, %v754
    %v756 = vrot.slane %v751, %v755
    %v757 = vadd.f32 %v677, %v693
    %v758 = vadd.f32 %v678, %v702
    %v759 = vadd.f32 %v679, %v711
    %v760 = vadd.f32 %v680, %v720
    %v761 = vadd.f32 %v681, %v729
    %v762 = vadd.f32 %v682, %v738
    %v763 = vadd.f32 %v683, %v747
    %v764 = vadd.f32 %v684, %v756
    %v765 = vlaneseq
    %vm766 = vcmp.ge.s32.totalorder %v765, 0
    %vm767 = vcmp.lt.s32.totalorder %v765, 256
    %vm768 = vmand %vm766, %vm767
    %769 = vst.msk [vmem:[#allocation2] sm:$0x3] %vm768, %v757
    %770 = vst.msk [vmem:[#allocation2 + $0x2] sm:$0x3] %vm768, %v758
    %771 = vst.msk [vmem:[#allocation2 + $0x4] sm:$0x3] %vm768, %v759
    %772 = vst.msk [vmem:[#allocation2 + $0x6] sm:$0x3] %vm768, %v760
    %773 = vst.msk [vmem:[#allocation2 + $0x8] sm:$0x3] %vm768, %v761
    %774 = vst.msk [vmem:[#allocation2 + $0xa] sm:$0x3] %vm768, %v762
    %775 = vst.msk [vmem:[#allocation2 + $0xc] sm:$0x3] %vm768, %v763
    %776 = vst.msk [vmem:[#allocation2 + $0xe] sm:$0x3] %vm768, %v764
    // Predicated region
    $region30: #{tpu_custom_call.1} parent=1 // pred_check
      _
    $region31: #{tpu_custom_call.1} parent=1 // pred_check_branch
      %778 = sbr.rel (0) target = $region33
    $region32: #{tpu_custom_call.1} parent=1 // pred_region
      %s780 = ssub.s32 256, 256
      %781 = vsyncadd [#allocation3], %s780
      %s782 = sshll.u32 [#allocation2], 4
      %s783 = int_to_ptr.vmem [resolvable:$true] %s782
      %788 = dma.vmem_to_hbm [thread:$0]  %s783, 256, %s7, [#allocation3], 32, 32, 2
    $region33: #{tpu_custom_call.1} parent=1 // pred_fallthru
      _
    // Predicated region
    $region34: #{tpu_custom_call.1} parent=1 // pred_check
      _
    $region35: #{tpu_custom_call.1} parent=1 // pred_check_branch
      %790 = sbr.rel (0) target = $region37
    $region36: #{tpu_custom_call.1} parent=1 // pred_region
      %791 = dma.done [#allocation3], 256
    $region37: #{tpu_custom_call.1} parent=1 // pred_fallthru
      _
    %792 = vsyncpa [#allocation3], 1

</llo_original>
